<compile_context>
chip_gen: v7x
topology: tpu7x:2x2x1
jax: 0.10.0
libtpu: 0.0.40
codegen_flags: <defaults>
</compile_context>

<pallas_src>
import functools

import jax
import jax.numpy as jnp
from jax.experimental import pallas as pl
from jax.experimental.pallas import tpu as pltpu

NEG_SLOPE = 0.01   # nn.LeakyReLU() default negative_slope
EPS = 1e-5         # nn.BatchNorm1d default eps
K = 3              # kernel_size


def _conv_bn_lrelu(h, w_ref, g_ref, b_ref, row_idx, n_batch):
    """One fused Conv1d(k=3, p=1) + BatchNorm1d(train) + LeakyReLU layer.

    h       : (N, Cin) f32 activation, N = L*B rows in l-major order (row = l*B + b).
    w_ref   : (3, Cin, Cout) bf16 conv weights, tap-major (tap 0 hits x[l-1]).
    g_ref   : (1, Cout) f32 BN gamma.
    b_ref   : (1, Cout) f32 BN beta.
    row_idx : (N, 1) int32 row index (for the tap edge masks).
    n_batch : B (static python int).
    returns : (N, Cout) f32.
    """
    n_rows = h.shape[0]

    # ---- Conv: three tap-accumulated MXU matmuls (bf16 operands, f32 acc). ----
    # Center tap (k=1): x[l].
    acc = jnp.dot(h.astype(jnp.bfloat16), w_ref[1],
                  preferred_element_type=jnp.float32)
    # Left tap (k=0): x[l-1]. Rows are l-major, so "previous l" is a roll by +B
    # rows (XLU sublane rotate); the first B rows (l == 0) get zero contribution.
    left = jnp.where(row_idx >= n_batch,
                     pltpu.roll(h, n_batch, axis=0), 0.0)
    acc = acc + jnp.dot(left.astype(jnp.bfloat16), w_ref[0],
                        preferred_element_type=jnp.float32)
    # Right tap (k=2): x[l+1] is a roll by -B (== N-B) rows; last B rows zeroed.
    right = jnp.where(row_idx < n_rows - n_batch,
                      pltpu.roll(h, n_rows - n_batch, axis=0), 0.0)
    acc = acc + jnp.dot(right.astype(jnp.bfloat16), w_ref[2],
                        preferred_element_type=jnp.float32)
    # Conv bias intentionally omitted: per-channel constant, cancelled exactly by
    # the training-mode BN mean subtraction below.

    # ---- BatchNorm1d (training-mode batch stats), folded scale/shift, f32. ----
    inv_n = 1.0 / float(n_rows)
    mean = jnp.sum(acc, axis=0, keepdims=True) * inv_n            # (1, Cout)
    cen = acc - mean                                              # (N, Cout)
    var = jnp.sum(cen * cen, axis=0, keepdims=True) * inv_n       # centered -> no cancellation
    scale = g_ref[...] * jax.lax.rsqrt(var + EPS)                 # (1, Cout)
    y = cen * scale + b_ref[...]                                  # single FMA-style pass

    # ---- LeakyReLU ----
    return jnp.where(y >= 0.0, y, NEG_SLOPE * y)


def fused_convlayers_kernel(x_ref,
                            w1_ref, g1_ref, b1_ref,
                            w2_ref, g2_ref, b2_ref,
                            w3_ref, g3_ref, b3_ref,
                            o_ref, *, n_batch):
    """All three layers fused; intermediates never leave VMEM/vregs.

    x_ref : (N, Cin) f32 input, N = L*B rows, l-major (row = l*B + b).
    wN    : (3, Cin_N, Cout_N) bf16 conv weights (tap, cin, cout).
    gN/bN : (1, Cout_N) f32 BN gamma / beta.
    o_ref : (N, Cout3) f32 -- already the row-major flattening of torch's
            x.permute(2, 0, 1) == (L, B, Cout3); one dense unmasked store.
    """
    n_rows = x_ref.shape[0]
    row_idx = jax.lax.broadcasted_iota(jnp.int32, (n_rows, 1), 0)

    h = x_ref[...].astype(jnp.float32)
    h = _conv_bn_lrelu(h, w1_ref, g1_ref, b1_ref, row_idx, n_batch)
    h = _conv_bn_lrelu(h, w2_ref, g2_ref, b2_ref, row_idx, n_batch)
    h = _conv_bn_lrelu(h, w3_ref, g3_ref, b3_ref, row_idx, n_batch)
    o_ref[...] = h


def conv_layers_fused(x_lb_c, layer_params, n_batch):
    """x_lb_c: (L*B, Cin) f32, l-major rows. layer_params: [(w_bf16(3,Cin,Cout), gamma, beta)]*3.

    Returns (L*B, Cout_last) f32; reshaping to (L, B, Cout_last) is free (same layout).
    """
    n_rows, _ = x_lb_c.shape
    c_out_last = layer_params[-1][0].shape[-1]

    flat_ins = [x_lb_c]
    in_specs = [pl.BlockSpec(x_lb_c.shape, lambda i: (0, 0))]
    for (w, g, bt) in layer_params:
        flat_ins += [w, g, bt]
        in_specs += [
            pl.BlockSpec(w.shape, lambda i: (0, 0, 0)),
            pl.BlockSpec(g.shape, lambda i: (0, 0)),
            pl.BlockSpec(bt.shape, lambda i: (0, 0)),
        ]

    kernel = functools.partial(fused_convlayers_kernel, n_batch=n_batch)

    return pl.pallas_call(
        kernel,
        out_shape=jax.ShapeDtypeStruct((n_rows, c_out_last), jnp.float32),
        grid_spec=pl.GridSpec(
            grid=(1,),
            in_specs=in_specs,
            out_specs=pl.BlockSpec((n_rows, c_out_last), lambda i: (0, 0)),
        ),
        compiler_params=pltpu.CompilerParams(
            dimension_semantics=("arbitrary",),
            # Leaves headroom on v7x (64 MiB physical VMEM); this kernel needs <1 MiB.
            vmem_limit_bytes=32 * 1024 * 1024,
        ),
    )(*flat_ins)


def init_params(key, in_channels, out_channels=(32, 64, 128)):
    """Deterministic init mimicking PyTorch Conv1d defaults (uniform +/- 1/sqrt(fan_in)).

    Conv biases are not generated: under training-mode BatchNorm they do not
    affect the forward output (cancelled by mean subtraction).
    """
    params = []
    cin = in_channels
    for cout in out_channels:
        key, kw = jax.random.split(key)
        bound = 1.0 / jnp.sqrt(jnp.float32(cin * K))
        w = jax.random.uniform(kw, (K, cin, cout), jnp.float32, -bound, bound)
        gamma = jnp.ones((1, cout), jnp.float32)
        beta = jnp.zeros((1, cout), jnp.float32)
        params.append((w, gamma, beta))
        cin = cout
    return params


@jax.jit
def conv_layers_forward(x_ncl, params):
    """x_ncl: (B, C_in, L) as in PyTorch NCL. Returns (L, B, C_out) like x.permute(2,0,1)."""
    B, _, L = x_ncl.shape
    # NCL -> (L, B, Cin) channels-last, l-major rows; negligible at these shapes.
    # TODO(synk): for production B*L, fold this input transpose into the kernel
    # (read the NCL block and pltpu.einshape into VMEM) to avoid an extra HBM pass.
    x = jnp.transpose(x_ncl, (2, 0, 1)).astype(jnp.float32).reshape(L * B, -1)
    kernel_params = [(w.astype(jnp.bfloat16), g, b) for (w, g, b) in params]
    out2d = conv_layers_fused(x, kernel_params, n_batch=B)
    return out2d.reshape(L, B, -1)


def _reference_forward(x_ncl, params):
    """Pure-JAX reference with the same bf16 matmul operands / f32 accumulation."""
    x = jnp.transpose(x_ncl, (0, 2, 1)).astype(jnp.float32)       # (B, L, C)
    for (w, g, b) in params:
        wb = w.astype(jnp.bfloat16)                               # (3, Cin, Cout)
        L = x.shape[1]
        xp = jnp.pad(x, ((0, 0), (1, 1), (0, 0)))                 # (B, L+2, Cin)
        acc = jnp.einsum('blc,cd->bld', xp[:, 1:L + 1].astype(jnp.bfloat16), wb[1],
                         preferred_element_type=jnp.float32)
        acc = acc + jnp.einsum('blc,cd->bld', xp[:, 0:L].astype(jnp.bfloat16), wb[0],
                               preferred_element_type=jnp.float32)
        acc = acc + jnp.einsum('blc,cd->bld', xp[:, 2:L + 2].astype(jnp.bfloat16), wb[2],
                               preferred_element_type=jnp.float32)
        mean = jnp.mean(acc, axis=(0, 1), keepdims=True)
        var = jnp.mean((acc - mean) ** 2, axis=(0, 1), keepdims=True)
        y = (acc - mean) * (g.reshape(1, 1, -1) * jax.lax.rsqrt(var + EPS)) \
            + b.reshape(1, 1, -1)
        x = jnp.where(y >= 0.0, y, NEG_SLOPE * y)
    return jnp.transpose(x, (1, 0, 2))                            # (L, B, C)


if __name__ == "__main__":
    B, CIN, L = 2, 4, 16                     # small shapes consistent with the module
    OUT_CHANNELS = (32, 64, 128)

    key = jax.random.PRNGKey(0)
    key, kx = jax.random.split(key)
    x = jax.random.normal(kx, (B, CIN, L), jnp.float32)   # PyTorch-style NCL input

    params = init_params(key, CIN, OUT_CHANNELS)
    out = conv_layers_forward(x, params)
    out = jax.block_until_ready(out)

    assert out.shape == (L, B, OUT_CHANNELS[-1]), out.shape
    assert bool(jnp.all(jnp.isfinite(out)))

    ref = jax.block_until_ready(_reference_forward(x, params))
    max_diff = float(jnp.max(jnp.abs(out - ref)))
    assert max_diff < 2e-2, f"kernel vs reference max abs diff = {max_diff}"

    print("KERNEL_OK")
</pallas_src>

<mosaic_0001>
module attributes {stable_mosaic.version = 11 : i64} {
  func.func @fused_convlayers_kernel(%arg0: i32, %arg1: memref<32x4xf32, #tpu.memory_space<vmem>>, %arg2: memref<3x4x32xbf16, #tpu.memory_space<vmem>>, %arg3: memref<1x32xf32, #tpu.memory_space<vmem>>, %arg4: memref<1x32xf32, #tpu.memory_space<vmem>>, %arg5: memref<3x32x64xbf16, #tpu.memory_space<vmem>>, %arg6: memref<1x64xf32, #tpu.memory_space<vmem>>, %arg7: memref<1x64xf32, #tpu.memory_space<vmem>>, %arg8: memref<3x64x128xbf16, #tpu.memory_space<vmem>>, %arg9: memref<1x128xf32, #tpu.memory_space<vmem>>, %arg10: memref<1x128xf32, #tpu.memory_space<vmem>>, %arg11: memref<32x128xf32, #tpu.memory_space<vmem>>) attributes {dimension_semantics = [#tpu.dimension_semantics<arbitrary>], iteration_bounds = array<i64: 1>, scalar_prefetch = 0 : i64, scratch_operands = 0 : i64, tpu.core_type = #tpu.core_type<tc>, window_params = [{pipeline_mode = #tpu.pipeline_mode<synchronous>, transform_indices = @transform_0, window_bounds = array<i64: 32, 4>}, {pipeline_mode = #tpu.pipeline_mode<synchronous>, transform_indices = @transform_1, window_bounds = array<i64: 3, 4, 32>}, {pipeline_mode = #tpu.pipeline_mode<synchronous>, transform_indices = @transform_2, window_bounds = array<i64: 1, 32>}, {pipeline_mode = #tpu.pipeline_mode<synchronous>, transform_indices = @transform_3, window_bounds = array<i64: 1, 32>}, {pipeline_mode = #tpu.pipeline_mode<synchronous>, transform_indices = @transform_4, window_bounds = array<i64: 3, 32, 64>}, {pipeline_mode = #tpu.pipeline_mode<synchronous>, transform_indices = @transform_5, window_bounds = array<i64: 1, 64>}, {pipeline_mode = #tpu.pipeline_mode<synchronous>, transform_indices = @transform_6, window_bounds = array<i64: 1, 64>}, {pipeline_mode = #tpu.pipeline_mode<synchronous>, transform_indices = @transform_7, window_bounds = array<i64: 3, 64, 128>}, {pipeline_mode = #tpu.pipeline_mode<synchronous>, transform_indices = @transform_8, window_bounds = array<i64: 1, 128>}, {pipeline_mode = #tpu.pipeline_mode<synchronous>, transform_indices = @transform_9, window_bounds = array<i64: 1, 128>}, {pipeline_mode = #tpu.pipeline_mode<synchronous>, transform_indices = @transform_10, window_bounds = array<i64: 32, 128>}]} {
    %0 = tpu.iota {dimensions = array<i32: 0>} : vector<32x1xi32>
    %c0 = arith.constant 0 : index
    %c0_0 = arith.constant 0 : index
    %1 = vector.load %arg1[%c0, %c0_0] : memref<32x4xf32, #tpu.memory_space<vmem>>, vector<32x4xf32>
    %2 = arith.truncf %1 : vector<32x4xf32> to vector<32x4xbf16>
    %c1 = arith.constant 1 : index
    %c0_1 = arith.constant 0 : index
    %c0_2 = arith.constant 0 : index
    %3 = vector.load %arg2[%c1, %c0_1, %c0_2] : memref<3x4x32xbf16, #tpu.memory_space<vmem>>, vector<1x4x32xbf16>
    %4 = vector.shape_cast %3 : vector<1x4x32xbf16> to vector<4x32xbf16>
    %cst = arith.constant dense<0.000000e+00> : vector<32x32xf32>
    %5 = tpu.matmul %2, %4, %cst {dimension_numbers = #tpu.dot_dimension_numbers<[1], [0], [0], [1], [0, 0, 1, 1], [], []>} : vector<32x4xbf16>, vector<4x32xbf16>, vector<32x32xf32> -> vector<32x32xf32>
    %c2_i32 = arith.constant 2 : i32
    %6 = vector.broadcast %c2_i32 : i32 to vector<32x1xi32>
    %7 = arith.cmpi sge, %0, %6 : vector<32x1xi32>
    %c2_i32_3 = arith.constant 2 : i32
    %8 = tpu.dynamic_rotate %1 by %c2_i32_3 dim 0 : vector<32x4xf32>, i32 -> vector<32x4xf32>
    %cst_4 = arith.constant 0.000000e+00 : f32
    %9 = vector.shape_cast %7 : vector<32x1xi1> to vector<32x1xi1>
    %10 = vector.broadcast %9 : vector<32x1xi1> to vector<32x4xi1>
    %11 = vector.broadcast %cst_4 : f32 to vector<32x4xf32>
    %12 = arith.select %10, %8, %11 : vector<32x4xi1>, vector<32x4xf32>
    %13 = arith.truncf %12 : vector<32x4xf32> to vector<32x4xbf16>
    %c0_5 = arith.constant 0 : index
    %c0_6 = arith.constant 0 : index
    %c0_7 = arith.constant 0 : index
    %14 = vector.load %arg2[%c0_5, %c0_6, %c0_7] : memref<3x4x32xbf16, #tpu.memory_space<vmem>>, vector<1x4x32xbf16>
    %15 = vector.shape_cast %14 : vector<1x4x32xbf16> to vector<4x32xbf16>
    %cst_8 = arith.constant dense<0.000000e+00> : vector<32x32xf32>
    %16 = tpu.matmul %13, %15, %cst_8 {dimension_numbers = #tpu.dot_dimension_numbers<[1], [0], [0], [1], [0, 0, 1, 1], [], []>} : vector<32x4xbf16>, vector<4x32xbf16>, vector<32x32xf32> -> vector<32x32xf32>
    %17 = arith.addf %5, %16 : vector<32x32xf32>
    %c30_i32 = arith.constant 30 : i32
    %18 = vector.broadcast %c30_i32 : i32 to vector<32x1xi32>
    %19 = arith.cmpi slt, %0, %18 : vector<32x1xi32>
    %c30_i32_9 = arith.constant 30 : i32
    %20 = tpu.dynamic_rotate %1 by %c30_i32_9 dim 0 : vector<32x4xf32>, i32 -> vector<32x4xf32>
    %cst_10 = arith.constant 0.000000e+00 : f32
    %21 = vector.shape_cast %19 : vector<32x1xi1> to vector<32x1xi1>
    %22 = vector.broadcast %21 : vector<32x1xi1> to vector<32x4xi1>
    %23 = vector.broadcast %cst_10 : f32 to vector<32x4xf32>
    %24 = arith.select %22, %20, %23 : vector<32x4xi1>, vector<32x4xf32>
    %25 = arith.truncf %24 : vector<32x4xf32> to vector<32x4xbf16>
    %c2 = arith.constant 2 : index
    %c0_11 = arith.constant 0 : index
    %c0_12 = arith.constant 0 : index
    %26 = vector.load %arg2[%c2, %c0_11, %c0_12] : memref<3x4x32xbf16, #tpu.memory_space<vmem>>, vector<1x4x32xbf16>
    %27 = vector.shape_cast %26 : vector<1x4x32xbf16> to vector<4x32xbf16>
    %cst_13 = arith.constant dense<0.000000e+00> : vector<32x32xf32>
    %28 = tpu.matmul %25, %27, %cst_13 {dimension_numbers = #tpu.dot_dimension_numbers<[1], [0], [0], [1], [0, 0, 1, 1], [], []>} : vector<32x4xbf16>, vector<4x32xbf16>, vector<32x32xf32> -> vector<32x32xf32>
    %29 = arith.addf %17, %28 : vector<32x32xf32>
    %cst_14 = arith.constant dense<0.000000e+00> : vector<32xf32>
    %30 = vector.multi_reduction <add>, %29, %cst_14 [0] : vector<32x32xf32> to vector<32xf32>
    %31 = vector.shape_cast %30 : vector<32xf32> to vector<1x32xf32>
    %cst_15 = arith.constant 3.125000e-02 : f32
    %32 = vector.broadcast %cst_15 : f32 to vector<1x32xf32>
    %33 = arith.mulf %31, %32 : vector<1x32xf32>
    %34 = vector.broadcast %33 : vector<1x32xf32> to vector<32x32xf32>
    %35 = arith.subf %29, %34 : vector<32x32xf32>
    %36 = arith.mulf %35, %35 : vector<32x32xf32>
    %cst_16 = arith.constant dense<0.000000e+00> : vector<32xf32>
    %37 = vector.multi_reduction <add>, %36, %cst_16 [0] : vector<32x32xf32> to vector<32xf32>
    %38 = vector.shape_cast %37 : vector<32xf32> to vector<1x32xf32>
    %cst_17 = arith.constant 3.125000e-02 : f32
    %39 = vector.broadcast %cst_17 : f32 to vector<1x32xf32>
    %40 = arith.mulf %38, %39 : vector<1x32xf32>
    %c0_18 = arith.constant 0 : index
    %c0_19 = arith.constant 0 : index
    %41 = vector.load %arg3[%c0_18, %c0_19] : memref<1x32xf32, #tpu.memory_space<vmem>>, vector<1x32xf32>
    %cst_20 = arith.constant 9.99999974E-6 : f32
    %42 = vector.broadcast %cst_20 : f32 to vector<1x32xf32>
    %43 = arith.addf %40, %42 : vector<1x32xf32>
    %44 = math.rsqrt %43 : vector<1x32xf32>
    %45 = arith.mulf %41, %44 : vector<1x32xf32>
    %46 = vector.broadcast %45 : vector<1x32xf32> to vector<32x32xf32>
    %47 = arith.mulf %35, %46 : vector<32x32xf32>
    %c0_21 = arith.constant 0 : index
    %c0_22 = arith.constant 0 : index
    %48 = vector.load %arg4[%c0_21, %c0_22] : memref<1x32xf32, #tpu.memory_space<vmem>>, vector<1x32xf32>
    %49 = vector.broadcast %48 : vector<1x32xf32> to vector<32x32xf32>
    %50 = arith.addf %47, %49 : vector<32x32xf32>
    %cst_23 = arith.constant 0.000000e+00 : f32
    %51 = vector.broadcast %cst_23 : f32 to vector<32x32xf32>
    %52 = arith.cmpf oge, %50, %51 : vector<32x32xf32>
    %cst_24 = arith.constant 0.00999999977 : f32
    %53 = vector.broadcast %cst_24 : f32 to vector<32x32xf32>
    %54 = arith.mulf %53, %50 : vector<32x32xf32>
    %55 = arith.select %52, %50, %54 : vector<32x32xi1>, vector<32x32xf32>
    %56 = arith.truncf %55 : vector<32x32xf32> to vector<32x32xbf16>
    %c1_25 = arith.constant 1 : index
    %c0_26 = arith.constant 0 : index
    %c0_27 = arith.constant 0 : index
    %57 = vector.load %arg5[%c1_25, %c0_26, %c0_27] : memref<3x32x64xbf16, #tpu.memory_space<vmem>>, vector<1x32x64xbf16>
    %58 = vector.shape_cast %57 : vector<1x32x64xbf16> to vector<32x64xbf16>
    %cst_28 = arith.constant dense<0.000000e+00> : vector<32x64xf32>
    %59 = tpu.matmul %56, %58, %cst_28 {dimension_numbers = #tpu.dot_dimension_numbers<[1], [0], [0], [1], [0, 0, 1, 1], [], []>} : vector<32x32xbf16>, vector<32x64xbf16>, vector<32x64xf32> -> vector<32x64xf32>
    %c2_i32_29 = arith.constant 2 : i32
    %60 = vector.broadcast %c2_i32_29 : i32 to vector<32x1xi32>
    %61 = arith.cmpi sge, %0, %60 : vector<32x1xi32>
    %c2_i32_30 = arith.constant 2 : i32
    %62 = tpu.dynamic_rotate %55 by %c2_i32_30 dim 0 : vector<32x32xf32>, i32 -> vector<32x32xf32>
    %cst_31 = arith.constant 0.000000e+00 : f32
    %63 = vector.shape_cast %61 : vector<32x1xi1> to vector<32x1xi1>
    %64 = vector.broadcast %63 : vector<32x1xi1> to vector<32x32xi1>
    %65 = vector.broadcast %cst_31 : f32 to vector<32x32xf32>
    %66 = arith.select %64, %62, %65 : vector<32x32xi1>, vector<32x32xf32>
    %67 = arith.truncf %66 : vector<32x32xf32> to vector<32x32xbf16>
    %c0_32 = arith.constant 0 : index
    %c0_33 = arith.constant 0 : index
    %c0_34 = arith.constant 0 : index
    %68 = vector.load %arg5[%c0_32, %c0_33, %c0_34] : memref<3x32x64xbf16, #tpu.memory_space<vmem>>, vector<1x32x64xbf16>
    %69 = vector.shape_cast %68 : vector<1x32x64xbf16> to vector<32x64xbf16>
    %cst_35 = arith.constant dense<0.000000e+00> : vector<32x64xf32>
    %70 = tpu.matmul %67, %69, %cst_35 {dimension_numbers = #tpu.dot_dimension_numbers<[1], [0], [0], [1], [0, 0, 1, 1], [], []>} : vector<32x32xbf16>, vector<32x64xbf16>, vector<32x64xf32> -> vector<32x64xf32>
    %71 = arith.addf %59, %70 : vector<32x64xf32>
    %c30_i32_36 = arith.constant 30 : i32
    %72 = vector.broadcast %c30_i32_36 : i32 to vector<32x1xi32>
    %73 = arith.cmpi slt, %0, %72 : vector<32x1xi32>
    %c30_i32_37 = arith.constant 30 : i32
    %74 = tpu.dynamic_rotate %55 by %c30_i32_37 dim 0 : vector<32x32xf32>, i32 -> vector<32x32xf32>
    %cst_38 = arith.constant 0.000000e+00 : f32
    %75 = vector.shape_cast %73 : vector<32x1xi1> to vector<32x1xi1>
    %76 = vector.broadcast %75 : vector<32x1xi1> to vector<32x32xi1>
    %77 = vector.broadcast %cst_38 : f32 to vector<32x32xf32>
    %78 = arith.select %76, %74, %77 : vector<32x32xi1>, vector<32x32xf32>
    %79 = arith.truncf %78 : vector<32x32xf32> to vector<32x32xbf16>
    %c2_39 = arith.constant 2 : index
    %c0_40 = arith.constant 0 : index
    %c0_41 = arith.constant 0 : index
    %80 = vector.load %arg5[%c2_39, %c0_40, %c0_41] : memref<3x32x64xbf16, #tpu.memory_space<vmem>>, vector<1x32x64xbf16>
    %81 = vector.shape_cast %80 : vector<1x32x64xbf16> to vector<32x64xbf16>
    %cst_42 = arith.constant dense<0.000000e+00> : vector<32x64xf32>
    %82 = tpu.matmul %79, %81, %cst_42 {dimension_numbers = #tpu.dot_dimension_numbers<[1], [0], [0], [1], [0, 0, 1, 1], [], []>} : vector<32x32xbf16>, vector<32x64xbf16>, vector<32x64xf32> -> vector<32x64xf32>
    %83 = arith.addf %71, %82 : vector<32x64xf32>
    %cst_43 = arith.constant dense<0.000000e+00> : vector<64xf32>
    %84 = vector.multi_reduction <add>, %83, %cst_43 [0] : vector<32x64xf32> to vector<64xf32>
    %85 = vector.shape_cast %84 : vector<64xf32> to vector<1x64xf32>
    %cst_44 = arith.constant 3.125000e-02 : f32
    %86 = vector.broadcast %cst_44 : f32 to vector<1x64xf32>
    %87 = arith.mulf %85, %86 : vector<1x64xf32>
    %88 = vector.broadcast %87 : vector<1x64xf32> to vector<32x64xf32>
    %89 = arith.subf %83, %88 : vector<32x64xf32>
    %90 = arith.mulf %89, %89 : vector<32x64xf32>
    %cst_45 = arith.constant dense<0.000000e+00> : vector<64xf32>
    %91 = vector.multi_reduction <add>, %90, %cst_45 [0] : vector<32x64xf32> to vector<64xf32>
    %92 = vector.shape_cast %91 : vector<64xf32> to vector<1x64xf32>
    %cst_46 = arith.constant 3.125000e-02 : f32
    %93 = vector.broadcast %cst_46 : f32 to vector<1x64xf32>
    %94 = arith.mulf %92, %93 : vector<1x64xf32>
    %c0_47 = arith.constant 0 : index
    %c0_48 = arith.constant 0 : index
    %95 = vector.load %arg6[%c0_47, %c0_48] : memref<1x64xf32, #tpu.memory_space<vmem>>, vector<1x64xf32>
    %cst_49 = arith.constant 9.99999974E-6 : f32
    %96 = vector.broadcast %cst_49 : f32 to vector<1x64xf32>
    %97 = arith.addf %94, %96 : vector<1x64xf32>
    %98 = math.rsqrt %97 : vector<1x64xf32>
    %99 = arith.mulf %95, %98 : vector<1x64xf32>
    %100 = vector.broadcast %99 : vector<1x64xf32> to vector<32x64xf32>
    %101 = arith.mulf %89, %100 : vector<32x64xf32>
    %c0_50 = arith.constant 0 : index
    %c0_51 = arith.constant 0 : index
    %102 = vector.load %arg7[%c0_50, %c0_51] : memref<1x64xf32, #tpu.memory_space<vmem>>, vector<1x64xf32>
    %103 = vector.broadcast %102 : vector<1x64xf32> to vector<32x64xf32>
    %104 = arith.addf %101, %103 : vector<32x64xf32>
    %cst_52 = arith.constant 0.000000e+00 : f32
    %105 = vector.broadcast %cst_52 : f32 to vector<32x64xf32>
    %106 = arith.cmpf oge, %104, %105 : vector<32x64xf32>
    %cst_53 = arith.constant 0.00999999977 : f32
    %107 = vector.broadcast %cst_53 : f32 to vector<32x64xf32>
    %108 = arith.mulf %107, %104 : vector<32x64xf32>
    %109 = arith.select %106, %104, %108 : vector<32x64xi1>, vector<32x64xf32>
    %110 = arith.truncf %109 : vector<32x64xf32> to vector<32x64xbf16>
    %c1_54 = arith.constant 1 : index
    %c0_55 = arith.constant 0 : index
    %c0_56 = arith.constant 0 : index
    %111 = vector.load %arg8[%c1_54, %c0_55, %c0_56] : memref<3x64x128xbf16, #tpu.memory_space<vmem>>, vector<1x64x128xbf16>
    %112 = vector.shape_cast %111 : vector<1x64x128xbf16> to vector<64x128xbf16>
    %cst_57 = arith.constant dense<0.000000e+00> : vector<32x128xf32>
    %113 = tpu.matmul %110, %112, %cst_57 {dimension_numbers = #tpu.dot_dimension_numbers<[1], [0], [0], [1], [0, 0, 1, 1], [], []>} : vector<32x64xbf16>, vector<64x128xbf16>, vector<32x128xf32> -> vector<32x128xf32>
    %c2_i32_58 = arith.constant 2 : i32
    %114 = vector.broadcast %c2_i32_58 : i32 to vector<32x1xi32>
    %115 = arith.cmpi sge, %0, %114 : vector<32x1xi32>
    %c2_i32_59 = arith.constant 2 : i32
    %116 = tpu.dynamic_rotate %109 by %c2_i32_59 dim 0 : vector<32x64xf32>, i32 -> vector<32x64xf32>
    %cst_60 = arith.constant 0.000000e+00 : f32
    %117 = vector.shape_cast %115 : vector<32x1xi1> to vector<32x1xi1>
    %118 = vector.broadcast %117 : vector<32x1xi1> to vector<32x64xi1>
    %119 = vector.broadcast %cst_60 : f32 to vector<32x64xf32>
    %120 = arith.select %118, %116, %119 : vector<32x64xi1>, vector<32x64xf32>
    %121 = arith.truncf %120 : vector<32x64xf32> to vector<32x64xbf16>
    %c0_61 = arith.constant 0 : index
    %c0_62 = arith.constant 0 : index
    %c0_63 = arith.constant 0 : index
    %122 = vector.load %arg8[%c0_61, %c0_62, %c0_63] : memref<3x64x128xbf16, #tpu.memory_space<vmem>>, vector<1x64x128xbf16>
    %123 = vector.shape_cast %122 : vector<1x64x128xbf16> to vector<64x128xbf16>
    %cst_64 = arith.constant dense<0.000000e+00> : vector<32x128xf32>
    %124 = tpu.matmul %121, %123, %cst_64 {dimension_numbers = #tpu.dot_dimension_numbers<[1], [0], [0], [1], [0, 0, 1, 1], [], []>} : vector<32x64xbf16>, vector<64x128xbf16>, vector<32x128xf32> -> vector<32x128xf32>
    %125 = arith.addf %113, %124 : vector<32x128xf32>
    %c30_i32_65 = arith.constant 30 : i32
    %126 = vector.broadcast %c30_i32_65 : i32 to vector<32x1xi32>
    %127 = arith.cmpi slt, %0, %126 : vector<32x1xi32>
    %c30_i32_66 = arith.constant 30 : i32
    %128 = tpu.dynamic_rotate %109 by %c30_i32_66 dim 0 : vector<32x64xf32>, i32 -> vector<32x64xf32>
    %cst_67 = arith.constant 0.000000e+00 : f32
    %129 = vector.shape_cast %127 : vector<32x1xi1> to vector<32x1xi1>
    %130 = vector.broadcast %129 : vector<32x1xi1> to vector<32x64xi1>
    %131 = vector.broadcast %cst_67 : f32 to vector<32x64xf32>
    %132 = arith.select %130, %128, %131 : vector<32x64xi1>, vector<32x64xf32>
    %133 = arith.truncf %132 : vector<32x64xf32> to vector<32x64xbf16>
    %c2_68 = arith.constant 2 : index
    %c0_69 = arith.constant 0 : index
    %c0_70 = arith.constant 0 : index
    %134 = vector.load %arg8[%c2_68, %c0_69, %c0_70] : memref<3x64x128xbf16, #tpu.memory_space<vmem>>, vector<1x64x128xbf16>
    %135 = vector.shape_cast %134 : vector<1x64x128xbf16> to vector<64x128xbf16>
    %cst_71 = arith.constant dense<0.000000e+00> : vector<32x128xf32>
    %136 = tpu.matmul %133, %135, %cst_71 {dimension_numbers = #tpu.dot_dimension_numbers<[1], [0], [0], [1], [0, 0, 1, 1], [], []>} : vector<32x64xbf16>, vector<64x128xbf16>, vector<32x128xf32> -> vector<32x128xf32>
    %137 = arith.addf %125, %136 : vector<32x128xf32>
    %cst_72 = arith.constant dense<0.000000e+00> : vector<128xf32>
    %138 = vector.multi_reduction <add>, %137, %cst_72 [0] : vector<32x128xf32> to vector<128xf32>
    %139 = vector.shape_cast %138 : vector<128xf32> to vector<1x128xf32>
    %cst_73 = arith.constant 3.125000e-02 : f32
    %140 = vector.broadcast %cst_73 : f32 to vector<1x128xf32>
    %141 = arith.mulf %139, %140 : vector<1x128xf32>
    %142 = vector.broadcast %141 : vector<1x128xf32> to vector<32x128xf32>
    %143 = arith.subf %137, %142 : vector<32x128xf32>
    %144 = arith.mulf %143, %143 : vector<32x128xf32>
    %cst_74 = arith.constant dense<0.000000e+00> : vector<128xf32>
    %145 = vector.multi_reduction <add>, %144, %cst_74 [0] : vector<32x128xf32> to vector<128xf32>
    %146 = vector.shape_cast %145 : vector<128xf32> to vector<1x128xf32>
    %cst_75 = arith.constant 3.125000e-02 : f32
    %147 = vector.broadcast %cst_75 : f32 to vector<1x128xf32>
    %148 = arith.mulf %146, %147 : vector<1x128xf32>
    %c0_76 = arith.constant 0 : index
    %c0_77 = arith.constant 0 : index
    %149 = vector.load %arg9[%c0_76, %c0_77] : memref<1x128xf32, #tpu.memory_space<vmem>>, vector<1x128xf32>
    %cst_78 = arith.constant 9.99999974E-6 : f32
    %150 = vector.broadcast %cst_78 : f32 to vector<1x128xf32>
    %151 = arith.addf %148, %150 : vector<1x128xf32>
    %152 = math.rsqrt %151 : vector<1x128xf32>
    %153 = arith.mulf %149, %152 : vector<1x128xf32>
    %154 = vector.broadcast %153 : vector<1x128xf32> to vector<32x128xf32>
    %155 = arith.mulf %143, %154 : vector<32x128xf32>
    %c0_79 = arith.constant 0 : index
    %c0_80 = arith.constant 0 : index
    %156 = vector.load %arg10[%c0_79, %c0_80] : memref<1x128xf32, #tpu.memory_space<vmem>>, vector<1x128xf32>
    %157 = vector.broadcast %156 : vector<1x128xf32> to vector<32x128xf32>
    %158 = arith.addf %155, %157 : vector<32x128xf32>
    %cst_81 = arith.constant 0.000000e+00 : f32
    %159 = vector.broadcast %cst_81 : f32 to vector<32x128xf32>
    %160 = arith.cmpf oge, %158, %159 : vector<32x128xf32>
    %cst_82 = arith.constant 0.00999999977 : f32
    %161 = vector.broadcast %cst_82 : f32 to vector<32x128xf32>
    %162 = arith.mulf %161, %158 : vector<32x128xf32>
    %163 = arith.select %160, %158, %162 : vector<32x128xi1>, vector<32x128xf32>
    %c0_83 = arith.constant 0 : index
    %c0_84 = arith.constant 0 : index
    %164 = vector.load %arg11[%c0_83, %c0_84] : memref<32x128xf32, #tpu.memory_space<vmem>>, vector<32x128xf32>
    tpu.vector_store %arg11[%c0_83, %c0_84], %163 {strides = array<i32>} : memref<32x128xf32, #tpu.memory_space<vmem>>, vector<32x128xf32>,
    return
  }
  func.func @transform_0(%arg0: i32) -> (i32, i32) {
    %c0_i32 = arith.constant 0 : i32
    %c0_i32_0 = arith.constant 0 : i32
    %c0_i32_1 = arith.constant 0 : i32
    return %c0_i32, %c0_i32_0 : i32, i32
  }
  func.func @transform_1(%arg0: i32) -> (i32, i32, i32) {
    %c0_i32 = arith.constant 0 : i32
    %c0_i32_0 = arith.constant 0 : i32
    %c0_i32_1 = arith.constant 0 : i32
    %c0_i32_2 = arith.constant 0 : i32
    return %c0_i32, %c0_i32_0, %c0_i32_1 : i32, i32, i32
  }
  func.func @transform_2(%arg0: i32) -> (i32, i32) {
    %c0_i32 = arith.constant 0 : i32
    %c0_i32_0 = arith.constant 0 : i32
    %c0_i32_1 = arith.constant 0 : i32
    return %c0_i32, %c0_i32_0 : i32, i32
  }
  func.func @transform_3(%arg0: i32) -> (i32, i32) {
    %c0_i32 = arith.constant 0 : i32
    %c0_i32_0 = arith.constant 0 : i32
    %c0_i32_1 = arith.constant 0 : i32
    return %c0_i32, %c0_i32_0 : i32, i32
  }
  func.func @transform_4(%arg0: i32) -> (i32, i32, i32) {
    %c0_i32 = arith.constant 0 : i32
    %c0_i32_0 = arith.constant 0 : i32
    %c0_i32_1 = arith.constant 0 : i32
    %c0_i32_2 = arith.constant 0 : i32
    return %c0_i32, %c0_i32_0, %c0_i32_1 : i32, i32, i32
  }
  func.func @transform_5(%arg0: i32) -> (i32, i32) {
    %c0_i32 = arith.constant 0 : i32
    %c0_i32_0 = arith.constant 0 : i32
    %c0_i32_1 = arith.constant 0 : i32
    return %c0_i32, %c0_i32_0 : i32, i32
  }
  func.func @transform_6(%arg0: i32) -> (i32, i32) {
    %c0_i32 = arith.constant 0 : i32
    %c0_i32_0 = arith.constant 0 : i32
    %c0_i32_1 = arith.constant 0 : i32
    return %c0_i32, %c0_i32_0 : i32, i32
  }
  func.func @transform_7(%arg0: i32) -> (i32, i32, i32) {
    %c0_i32 = arith.constant 0 : i32
    %c0_i32_0 = arith.constant 0 : i32
    %c0_i32_1 = arith.constant 0 : i32
    %c0_i32_2 = arith.constant 0 : i32
    return %c0_i32, %c0_i32_0, %c0_i32_1 : i32, i32, i32
  }
  func.func @transform_8(%arg0: i32) -> (i32, i32) {
    %c0_i32 = arith.constant 0 : i32
    %c0_i32_0 = arith.constant 0 : i32
    %c0_i32_1 = arith.constant 0 : i32
    return %c0_i32, %c0_i32_0 : i32, i32
  }
  func.func @transform_9(%arg0: i32) -> (i32, i32) {
    %c0_i32 = arith.constant 0 : i32
    %c0_i32_0 = arith.constant 0 : i32
    %c0_i32_1 = arith.constant 0 : i32
    return %c0_i32, %c0_i32_0 : i32, i32
  }
  func.func @transform_10(%arg0: i32) -> (i32, i32) {
    %c0_i32 = arith.constant 0 : i32
    %c0_i32_0 = arith.constant 0 : i32
    %c0_i32_1 = arith.constant 0 : i32
    return %c0_i32, %c0_i32_0 : i32, i32
  }
}

</mosaic_0001>

<llo_original>
// kernel: conv_layers_forward.1
$region0: #{conv_layers_forward.1}
  #allocation0 [shape = 'u32[]', space=smem, size = 0x4, offset = 0x4, fixed_abs, tag = 'smem constant byte address 0x4 - core index']
  #allocation1 [shape = 'u32[144,128]{1,0:T(1,128)}', space=vmem, size = 0x12000, scoped, tag = 'internal scratch']
  %s0 = inlined_call_operand.vmem [shape: f32[32,4], index: 0, kind: input, shape index: {}]
  %s1 = inlined_call_operand.vmem [shape: bf16[3,4,32], index: 1, kind: input, shape index: {}]
  %s2 = inlined_call_operand.vmem [shape: f32[1,32], index: 2, kind: input, shape index: {}]
  %s3 = inlined_call_operand.vmem [shape: f32[1,32], index: 3, kind: input, shape index: {}]
  %s4 = inlined_call_operand.vmem [shape: bf16[3,32,64], index: 4, kind: input, shape index: {}]
  %s5 = inlined_call_operand.vmem [shape: f32[1,64], index: 5, kind: input, shape index: {}]
  %s6 = inlined_call_operand.vmem [shape: f32[1,64], index: 6, kind: input, shape index: {}]
  %s7 = inlined_call_operand.vmem [shape: bf16[3,64,128], index: 7, kind: input, shape index: {}]
  %s8 = inlined_call_operand.vmem [shape: f32[1,128], index: 8, kind: input, shape index: {}]
  %s9 = inlined_call_operand.vmem [shape: f32[1,128], index: 9, kind: input, shape index: {}]
  %s10 = inlined_call_operand.hbm [shape: f32[32,128], index: 10, kind: output, shape index: {}]
  %s11 = sld [smem:[#allocation0]]
  $region50: #{conv_layers_forward.1} parent=0
    _
  %s13 = ssub.s32 1, %s11
  %s14 = scalar_select 0, %s13, %s11
  $region1: #{conv_layers_forward.1} parent=0
    #allocation2 [shape = 'u8[16384]{0}', space=vmem, size = 0x4000, scoped, tag = 'output window, operand 0, single buffered']
    #allocation3 [shape = 's32[1]{0}', space=sflag, size = 0x4, scoped, tag = 'scoped memory for conv_layers_forward.1']
    %15 = vsyncpa [#allocation3], 0
    // Predicated region
    $region2: #{conv_layers_forward.1} parent=1 // pred_check
      _
    $region3: #{conv_layers_forward.1} parent=1 // pred_check_branch
      %17 = sbr.rel (0) target = $region5
    $region4: #{conv_layers_forward.1} parent=1 // pred_region
      _
    $region5: #{conv_layers_forward.1} parent=1 // pred_fallthru
      _
    // Predicated region
    $region6: #{conv_layers_forward.1} parent=1 // pred_check
      _
    $region7: #{conv_layers_forward.1} parent=1 // pred_check_branch
      %19 = sbr.rel (0) target = $region9
    $region8: #{conv_layers_forward.1} parent=1 // pred_region
      _
    $region9: #{conv_layers_forward.1} parent=1 // pred_fallthru
      _
    // Predicated region
    $region10: #{conv_layers_forward.1} parent=1 // pred_check
      _
    $region11: #{conv_layers_forward.1} parent=1 // pred_check_branch
      %21 = sbr.rel (0) target = $region13
    $region12: #{conv_layers_forward.1} parent=1 // pred_region
      _
    $region13: #{conv_layers_forward.1} parent=1 // pred_fallthru
      _
    // Predicated region
    $region14: #{conv_layers_forward.1} parent=1 // pred_check
      _
    $region15: #{conv_layers_forward.1} parent=1 // pred_check_branch
      %23 = sbr.rel (0) target = $region17
    $region16: #{conv_layers_forward.1} parent=1 // pred_region
      _
    $region17: #{conv_layers_forward.1} parent=1 // pred_fallthru
      _
    // Predicated region
    $region18: #{conv_layers_forward.1} parent=1 // pred_check
      _
    $region19: #{conv_layers_forward.1} parent=1 // pred_check_branch
      %25 = sbr.rel (0) target = $region21
    $region20: #{conv_layers_forward.1} parent=1 // pred_region
      _
    $region21: #{conv_layers_forward.1} parent=1 // pred_fallthru
      _
    // Predicated region
    $region22: #{conv_layers_forward.1} parent=1 // pred_check
      _
    $region23: #{conv_layers_forward.1} parent=1 // pred_check_branch
      %27 = sbr.rel (0) target = $region25
    $region24: #{conv_layers_forward.1} parent=1 // pred_region
      _
    $region25: #{conv_layers_forward.1} parent=1 // pred_fallthru
      _
    // Predicated region
    $region26: #{conv_layers_forward.1} parent=1 // pred_check
      _
    $region27: #{conv_layers_forward.1} parent=1 // pred_check_branch
      %29 = sbr.rel (0) target = $region29
    $region28: #{conv_layers_forward.1} parent=1 // pred_region
      _
    $region29: #{conv_layers_forward.1} parent=1 // pred_fallthru
      _
    // Predicated region
    $region30: #{conv_layers_forward.1} parent=1 // pred_check
      _
    $region31: #{conv_layers_forward.1} parent=1 // pred_check_branch
      %31 = sbr.rel (0) target = $region33
    $region32: #{conv_layers_forward.1} parent=1 // pred_region
      _
    $region33: #{conv_layers_forward.1} parent=1 // pred_fallthru
      _
    // Predicated region
    $region34: #{conv_layers_forward.1} parent=1 // pred_check
      _
    $region35: #{conv_layers_forward.1} parent=1 // pred_check_branch
      %33 = sbr.rel (0) target = $region37
    $region36: #{conv_layers_forward.1} parent=1 // pred_region
      _
    $region37: #{conv_layers_forward.1} parent=1 // pred_fallthru
      _
    // Predicated region
    $region38: #{conv_layers_forward.1} parent=1 // pred_check
      _
    $region39: #{conv_layers_forward.1} parent=1 // pred_check_branch
      %35 = sbr.rel (0) target = $region41
    $region40: #{conv_layers_forward.1} parent=1 // pred_region
      _
    $region41: #{conv_layers_forward.1} parent=1 // pred_fallthru
      _
    %v37 = vlaneseq
    %v38 = vshrl.u32 %v37, 7
    %v39 = vadd.s32 %v38, 8
    %v40 = vadd.s32 %v38, 16
    %v41 = vadd.s32 %v38, 24
    %v42 = vld [vmem:[%s0] sm:$0xff]
    %v43 = vld [vmem:[%s0 + $0x8] sm:$0xff]
    %v44 = vld [vmem:[%s0 + $0x10] sm:$0xff]
    %v45 = vld [vmem:[%s0 + $0x18] sm:$0xff]
    %v46 = vpack.c.bf16 %v43, %v42
    %v47 = vpack.c.bf16 %v45, %v44
    %s48 = scalar_lea.vmem %s1, 2
    %v49 = vld [vmem:[%s48] sm:$0x3]
    %vm50 = vcmp.ge.s32.totalorder %v38, 2
    %vm51 = vcmp.ge.s32.totalorder %v39, 2
    %vm52 = vcmp.ge.s32.totalorder %v40, 2
    %vm53 = vcmp.ge.s32.totalorder %v41, 2
    %v54 = vrot.slane %v42, 6
    %v55 = vrot.slane %v43, 6
    %v56 = vrot.slane %v44, 6
    %v57 = vrot.slane %v45, 6
    %vm58 = vcmp.lt.s32.totalorder %v38, 2
    %v59 = vsel %vm58, %v56, %v57
    %v60 = vsel %vm58, %v55, %v56
    %v61 = vsel %vm58, %v54, %v55
    %v62 = vsel %vm58, %v57, %v54
    %v63 = vsel %vm50, 1, 0
    %v64 = vsel %vm51, 1, 0
    %v65 = vsel %vm52, 1, 0
    %v66 = vsel %vm53, 1, 0
    %vm67 = vcmp.eq.s32.totalorder %v63, 1
    %vm68 = vcmp.eq.s32.totalorder %v64, 1
    %vm69 = vcmp.eq.s32.totalorder %v65, 1
    %vm70 = vcmp.eq.s32.totalorder %v66, 1
    %v71 = vsel %vm67, %v62, 0.0
    %v72 = vsel %vm68, %v61, 0.0
    %v73 = vsel %vm69, %v60, 0.0
    %v74 = vsel %vm70, %v59, 0.0
    %v75 = vpack.c.bf16 %v72, %v71
    %v76 = vpack.c.bf16 %v74, %v73
    %v77 = vld [vmem:[%s1] sm:$0x3]
    %vm78 = vcmask 31744
    %v80 = vsel %vm78, %v75, 0
    %v83 = vsel %vm78, %v76, 0
    %vm85 = vcmask 1041408
    %v87 = vsel %vm85, %v77, 0
    %89 = vmatprep.subr.bf16.mxu0 0
    %90 = vmatpush1.bf16.msra.mxu0 %v87
    %91 = vmatprep.subr.bf16.mxu0 0
    %92 = vmatpush1.bf16.msra.mxu0 0
    %93 = vmatprep.subr.bf16.mxu0 0
    %94 = vmatpush1.bf16.msra.mxu0 0
    %95 = vmatprep.subr.bf16.mxu0 0
    %96 = vmatpush1.bf16.msra.mxu0 0
    %97 = vmatprep.subr.bf16.mxu0 0
    %98 = vmatpush1.bf16.msra.mxu0 0
    %99 = vmatprep.subr.bf16.mxu0 0
    %100 = vmatpush1.bf16.msra.mxu0 0
    %101 = vmatprep.subr.bf16.mxu0 0
    %102 = vmatpush1.bf16.msra.mxu0 0
    %103 = vmatprep.subr.bf16.mxu0 0
    %104 = vmatpush1.bf16.msra.mxu0 0
    %105 = vmatprep.subr.bf16.mxu0 0
    %106 = vmatpush1.bf16.msra.mxu0 0
    %107 = vmatprep.subr.bf16.mxu0 0
    %108 = vmatpush1.bf16.msra.mxu0 0
    %109 = vmatprep.subr.bf16.mxu0 0
    %110 = vmatpush1.bf16.msra.mxu0 0
    %111 = vmatprep.subr.bf16.mxu0 0
    %112 = vmatpush1.bf16.msra.mxu0 0
    %113 = vmatprep.subr.bf16.mxu0 0
    %114 = vmatpush1.bf16.msra.mxu0 0
    %115 = vmatprep.subr.bf16.mxu0 0
    %116 = vmatpush1.bf16.msra.mxu0 0
    %117 = vmatprep.subr.bf16.mxu0 0
    %118 = vmatpush1.bf16.msra.mxu0 0
    %119 = vmatprep.subr.bf16.mxu0 0
    %120 = vmatpush1.bf16.msra.mxu0 0
    %121 = vmatprep.mubr.bf16.mxu0 0
    %122 = vmatmul.mubr.bf16.gmra.mrb[0].mxu0 %v80
    %v123 = vpop.f32.mrb[0].mxu0
    %v124 = vadd.f32 0.0, %v123
    %v125 = vpop.f32.mrb[0].mxu0
    %v126 = vpop.f32.mrb[0].mxu0
    %v127 = vadd.f32 0.0, %v126
    %v128 = vpop.f32.mrb[0].mxu0
    %129 = vmatprep.mubr.bf16.mxu0 0
    %130 = vmatmul.mubr.bf16.gmra.mrb[0].mxu0 %v83
    %v131 = vpop.f32.mrb[0].mxu0
    %v132 = vadd.f32 0.0, %v131
    %v133 = vpop.f32.mrb[0].mxu0
    %v134 = vpop.f32.mrb[0].mxu0
    %v135 = vadd.f32 0.0, %v134
    %v136 = vpop.f32.mrb[0].mxu0
    %137 = vdwg.mxu0
    %v139 = vsel %vm78, %v46, 0
    %v142 = vsel %vm78, %v47, 0
    %v145 = vsel %vm85, %v49, 0
    %147 = vmatprep.subr.bf16.mxu0 0
    %148 = vmatpush1.bf16.msra.mxu0 %v145
    %149 = vmatprep.subr.bf16.mxu0 0
    %150 = vmatpush1.bf16.msra.mxu0 0
    %151 = vmatprep.subr.bf16.mxu0 0
    %152 = vmatpush1.bf16.msra.mxu0 0
    %153 = vmatprep.subr.bf16.mxu0 0
    %154 = vmatpush1.bf16.msra.mxu0 0
    %155 = vmatprep.subr.bf16.mxu0 0
    %156 = vmatpush1.bf16.msra.mxu0 0
    %157 = vmatprep.subr.bf16.mxu0 0
    %158 = vmatpush1.bf16.msra.mxu0 0
    %159 = vmatprep.subr.bf16.mxu0 0
    %160 = vmatpush1.bf16.msra.mxu0 0
    %161 = vmatprep.subr.bf16.mxu0 0
    %162 = vmatpush1.bf16.msra.mxu0 0
    %163 = vmatprep.subr.bf16.mxu0 0
    %164 = vmatpush1.bf16.msra.mxu0 0
    %165 = vmatprep.subr.bf16.mxu0 0
    %166 = vmatpush1.bf16.msra.mxu0 0
    %167 = vmatprep.subr.bf16.mxu0 0
    %168 = vmatpush1.bf16.msra.mxu0 0
    %169 = vmatprep.subr.bf16.mxu0 0
    %170 = vmatpush1.bf16.msra.mxu0 0
    %171 = vmatprep.subr.bf16.mxu0 0
    %172 = vmatpush1.bf16.msra.mxu0 0
    %173 = vmatprep.subr.bf16.mxu0 0
    %174 = vmatpush1.bf16.msra.mxu0 0
    %175 = vmatprep.subr.bf16.mxu0 0
    %176 = vmatpush1.bf16.msra.mxu0 0
    %177 = vmatprep.subr.bf16.mxu0 0
    %178 = vmatpush1.bf16.msra.mxu0 0
    %179 = vmatprep.mubr.bf16.mxu0 0
    %180 = vmatmul.mubr.bf16.gmra.mrb[0].mxu0 %v139
    %v181 = vpop.f32.mrb[0].mxu0
    %v182 = vadd.f32 %v124, %v181
    %v183 = vpop.f32.mrb[0].mxu0
    %v184 = vpop.f32.mrb[0].mxu0
    %v185 = vadd.f32 %v127, %v184
    %v186 = vpop.f32.mrb[0].mxu0
    %187 = vmatprep.mubr.bf16.mxu0 0
    %188 = vmatmul.mubr.bf16.gmra.mrb[0].mxu0 %v142
    %v189 = vpop.f32.mrb[0].mxu0
    %v190 = vadd.f32 %v132, %v189
    %v191 = vpop.f32.mrb[0].mxu0
    %v192 = vpop.f32.mrb[0].mxu0
    %v193 = vadd.f32 %v135, %v192
    %v194 = vpop.f32.mrb[0].mxu0
    %195 = vdwg.mxu0
    %vm196 = vcmp.lt.s32.totalorder %v38, 30
    %vm197 = vcmp.lt.s32.totalorder %v39, 30
    %vm198 = vcmp.lt.s32.totalorder %v40, 30
    %vm199 = vcmp.lt.s32.totalorder %v41, 30
    %v200 = vrot.slane %v42, 2
    %v201 = vrot.slane %v43, 2
    %v202 = vrot.slane %v44, 2
    %v203 = vrot.slane %v45, 2
    %vm204 = vcmp.lt.s32.totalorder %v38, 6
    %v205 = vsel %vm204, %v202, %v203
    %v206 = vsel %vm204, %v201, %v202
    %v207 = vsel %vm204, %v200, %v201
    %v208 = vsel %vm204, %v203, %v200
    %v209 = vsel %vm196, 1, 0
    %v210 = vsel %vm197, 1, 0
    %v211 = vsel %vm198, 1, 0
    %v212 = vsel %vm199, 1, 0
    %vm213 = vcmp.eq.s32.totalorder %v209, 1
    %vm214 = vcmp.eq.s32.totalorder %v210, 1
    %vm215 = vcmp.eq.s32.totalorder %v211, 1
    %vm216 = vcmp.eq.s32.totalorder %v212, 1
    %v217 = vsel %vm213, %v207, 0.0
    %v218 = vsel %vm214, %v206, 0.0
    %v219 = vsel %vm215, %v205, 0.0
    %v220 = vsel %vm216, %v208, 0.0
    %v221 = vpack.c.bf16 %v218, %v217
    %v222 = vpack.c.bf16 %v220, %v219
    %s223 = scalar_lea.vmem %s1, 4
    %v224 = vld [vmem:[%s223] sm:$0x3]
    %v226 = vsel %vm78, %v221, 0
    %v229 = vsel %vm78, %v222, 0
    %v232 = vsel %vm85, %v224, 0
    %234 = vmatprep.subr.bf16.mxu0 0
    %235 = vmatpush1.bf16.msra.mxu0 %v232
    %236 = vmatprep.subr.bf16.mxu0 0
    %237 = vmatpush1.bf16.msra.mxu0 0
    %238 = vmatprep.subr.bf16.mxu0 0
    %239 = vmatpush1.bf16.msra.mxu0 0
    %240 = vmatprep.subr.bf16.mxu0 0
    %241 = vmatpush1.bf16.msra.mxu0 0
    %242 = vmatprep.subr.bf16.mxu0 0
    %243 = vmatpush1.bf16.msra.mxu0 0
    %244 = vmatprep.subr.bf16.mxu0 0
    %245 = vmatpush1.bf16.msra.mxu0 0
    %246 = vmatprep.subr.bf16.mxu0 0
    %247 = vmatpush1.bf16.msra.mxu0 0
    %248 = vmatprep.subr.bf16.mxu0 0
    %249 = vmatpush1.bf16.msra.mxu0 0
    %250 = vmatprep.subr.bf16.mxu0 0
    %251 = vmatpush1.bf16.msra.mxu0 0
    %252 = vmatprep.subr.bf16.mxu0 0
    %253 = vmatpush1.bf16.msra.mxu0 0
    %254 = vmatprep.subr.bf16.mxu0 0
    %255 = vmatpush1.bf16.msra.mxu0 0
    %256 = vmatprep.subr.bf16.mxu0 0
    %257 = vmatpush1.bf16.msra.mxu0 0
    %258 = vmatprep.subr.bf16.mxu0 0
    %259 = vmatpush1.bf16.msra.mxu0 0
    %260 = vmatprep.subr.bf16.mxu0 0
    %261 = vmatpush1.bf16.msra.mxu0 0
    %262 = vmatprep.subr.bf16.mxu0 0
    %263 = vmatpush1.bf16.msra.mxu0 0
    %264 = vmatprep.subr.bf16.mxu0 0
    %265 = vmatpush1.bf16.msra.mxu0 0
    %266 = vmatprep.mubr.bf16.mxu0 0
    %267 = vmatmul.mubr.bf16.gmra.mrb[0].mxu0 %v226
    %v268 = vpop.f32.mrb[0].mxu0
    %v269 = vadd.f32 0.0, %v268
    %v270 = vpop.f32.mrb[0].mxu0
    %v271 = vpop.f32.mrb[0].mxu0
    %v272 = vadd.f32 0.0, %v271
    %v273 = vpop.f32.mrb[0].mxu0
    %274 = vmatprep.mubr.bf16.mxu0 0
    %275 = vmatmul.mubr.bf16.gmra.mrb[0].mxu0 %v229
    %v276 = vpop.f32.mrb[0].mxu0
    %v277 = vadd.f32 0.0, %v276
    %v278 = vpop.f32.mrb[0].mxu0
    %v279 = vpop.f32.mrb[0].mxu0
    %v280 = vadd.f32 0.0, %v279
    %v281 = vpop.f32.mrb[0].mxu0
    %282 = vdwg.mxu0
    %v283 = vadd.f32 %v182, %v269
    %v284 = vadd.f32 %v185, %v272
    %v285 = vadd.f32 %v190, %v277
    %v286 = vadd.f32 %v193, %v280
    %vm287 = vcmask 261120
    %v288 = vsel %vm287, %v283, 0.0
    %v289 = vsel %vm287, %v284, 0.0
    %v290 = vadd.f32 %v288, %v289
    %v291 = vsel %vm287, %v285, 0.0
    %v292 = vadd.f32 %v290, %v291
    %v293 = vsel %vm287, %v286, 0.0
    %v294 = vadd.f32 %v292, %v293
    %v295 = vrot.slane %v294, 4
    %v296 = vadd.f32 %v294, %v295
    %v297 = vrot.slane %v296, 2
    %v298 = vadd.f32 %v296, %v297
    %v299 = vrot.slane %v298, 1
    %v300 = vadd.f32 %v298, %v299
    %v301 = vmul.f32 %v300, 0.03125
    %v302 = vsub.f32 %v283, %v301
    %v303 = vsub.f32 %v284, %v301
    %v304 = vsub.f32 %v285, %v301
    %v305 = vsub.f32 %v286, %v301
    %v306 = vmul.f32 %v302, %v302
    %v307 = vmul.f32 %v303, %v303
    %v308 = vmul.f32 %v304, %v304
    %v309 = vmul.f32 %v305, %v305
    %v310 = vsel %vm287, %v306, 0.0
    %v311 = vsel %vm287, %v307, 0.0
    %v312 = vadd.f32 %v310, %v311
    %v313 = vsel %vm287, %v308, 0.0
    %v314 = vadd.f32 %v312, %v313
    %v315 = vsel %vm287, %v309, 0.0
    %v316 = vadd.f32 %v314, %v315
    %v317 = vrot.slane %v316, 4
    %v318 = vadd.f32 %v316, %v317
    %v319 = vrot.slane %v318, 2
    %v320 = vadd.f32 %v318, %v319
    %v321 = vrot.slane %v320, 1
    %v322 = vadd.f32 %v320, %v321
    %v323 = vmul.f32 %v322, 0.03125
    %v324 = vld [vmem:[%s2] sm:$0x1]
    %v325 = vadd.f32 %v323, 1e-05
    %v326 = vrsqrt.pop %v325
    %v327 = vmul.f32 %v324, %v326
    %v329 = vlaneseq
    %v330 = vshrl.u32 %v329, 7
    %v331 = vsub.s32 0, %v330
    %v332 = vrot.slane %v327, %v331
    %v334 = vmul.f32 %v302, %v332
    %v335 = vmul.f32 %v303, %v332
    %v336 = vmul.f32 %v304, %v332
    %v337 = vmul.f32 %v305, %v332
    %v338 = vld [vmem:[%s3] sm:$0x1]
    %v340 = vlaneseq
    %v341 = vshrl.u32 %v340, 7
    %v342 = vsub.s32 0, %v341
    %v343 = vrot.slane %v338, %v342
    %v345 = vadd.f32 %v334, %v343
    %v346 = vadd.f32 %v335, %v343
    %v347 = vadd.f32 %v336, %v343
    %v348 = vadd.f32 %v337, %v343
    %vm349 = vcmp.ge.f32.partialorder %v345, 0.0
    %vm350 = vcmp.ge.f32.partialorder %v346, 0.0
    %vm351 = vcmp.ge.f32.partialorder %v347, 0.0
    %vm352 = vcmp.ge.f32.partialorder %v348, 0.0
    %v353 = vmul.f32 %v345, 0.01
    %v354 = vmul.f32 %v346, 0.01
    %v355 = vmul.f32 %v347, 0.01
    %v356 = vmul.f32 %v348, 0.01
    %v357 = vsel %vm349, %v345, %v353
    %v358 = vsel %vm350, %v346, %v354
    %v359 = vsel %vm351, %v347, %v355
    %v360 = vsel %vm352, %v348, %v356
    %v361 = vpack.c.bf16 %v358, %v357
    %v362 = vpack.c.bf16 %v360, %v359
    %s363 = scalar_lea.vmem %s4, 16
    %v364 = vld [vmem:[%s363] sm:$0xf]
    %v365 = vld [vmem:[%s363 + $0x4] sm:$0xf]
    %v366 = vld [vmem:[%s363 + $0x8] sm:$0xf]
    %v367 = vld [vmem:[%s363 + $0xc] sm:$0xf]
    %v368 = vrot.slane %v357, 6
    %v369 = vrot.slane %v358, 6
    %v370 = vrot.slane %v359, 6
    %v371 = vrot.slane %v360, 6
    %v372 = vsel %vm58, %v370, %v371
    %v373 = vsel %vm58, %v369, %v370
    %v374 = vsel %vm58, %v368, %v369
    %v375 = vsel %vm58, %v371, %v368
    %v376 = vsel %vm67, %v375, 0.0
    %v377 = vsel %vm68, %v374, 0.0
    %v378 = vsel %vm69, %v373, 0.0
    %v379 = vsel %vm70, %v372, 0.0
    %v380 = vpack.c.bf16 %v377, %v376
    %v381 = vpack.c.bf16 %v379, %v378
    %v382 = vld [vmem:[%s4] sm:$0xf]
    %v383 = vld [vmem:[%s4 + $0x4] sm:$0xf]
    %v384 = vld [vmem:[%s4 + $0x8] sm:$0xf]
    %v385 = vld [vmem:[%s4 + $0xc] sm:$0xf]
    %v390 = vunpack.c.l.b16 %v382
    %v391 = vunpack.c.l.b16 %v383
    %v392 = vunpack.c.l.b16 %v384
    %v393 = vunpack.c.l.b16 %v385
    %v394 = vpack.c.b16 %v391, %v390
    %v395 = vpack.c.b16 %v393, %v392
    %v399 = vsel %vm287, %v380, 0
    %v402 = vsel %vm287, %v381, 0
    %404 = vmatprep.subr.bf16.mxu0 0
    %405 = vmatpush1.bf16.msra.mxu0 %v394
    %406 = vmatprep.subr.bf16.mxu0 0
    %407 = vmatpush1.bf16.msra.mxu0 %v395
    %408 = vmatprep.subr.bf16.mxu0 0
    %409 = vmatpush1.bf16.msra.mxu0 0
    %410 = vmatprep.subr.bf16.mxu0 0
    %411 = vmatpush1.bf16.msra.mxu0 0
    %412 = vmatprep.subr.bf16.mxu0 0
    %413 = vmatpush1.bf16.msra.mxu0 0
    %414 = vmatprep.subr.bf16.mxu0 0
    %415 = vmatpush1.bf16.msra.mxu0 0
    %416 = vmatprep.subr.bf16.mxu0 0
    %417 = vmatpush1.bf16.msra.mxu0 0
    %418 = vmatprep.subr.bf16.mxu0 0
    %419 = vmatpush1.bf16.msra.mxu0 0
    %420 = vmatprep.subr.bf16.mxu0 0
    %421 = vmatpush1.bf16.msra.mxu0 0
    %422 = vmatprep.subr.bf16.mxu0 0
    %423 = vmatpush1.bf16.msra.mxu0 0
    %424 = vmatprep.subr.bf16.mxu0 0
    %425 = vmatpush1.bf16.msra.mxu0 0
    %426 = vmatprep.subr.bf16.mxu0 0
    %427 = vmatpush1.bf16.msra.mxu0 0
    %428 = vmatprep.subr.bf16.mxu0 0
    %429 = vmatpush1.bf16.msra.mxu0 0
    %430 = vmatprep.subr.bf16.mxu0 0
    %431 = vmatpush1.bf16.msra.mxu0 0
    %432 = vmatprep.subr.bf16.mxu0 0
    %433 = vmatpush1.bf16.msra.mxu0 0
    %434 = vmatprep.subr.bf16.mxu0 0
    %435 = vmatpush1.bf16.msra.mxu0 0
    %436 = vmatprep.mubr.bf16.mxu0 0
    %437 = vmatmul.mubr.bf16.gmra.mrb[0].mxu0 %v399
    %v438 = vpop.f32.mrb[0].mxu0
    %v439 = vadd.f32 0.0, %v438
    %v440 = vpop.f32.mrb[0].mxu0
    %v441 = vpop.f32.mrb[0].mxu0
    %v442 = vadd.f32 0.0, %v441
    %v443 = vpop.f32.mrb[0].mxu0
    %444 = vmatprep.mubr.bf16.mxu0 0
    %445 = vmatmul.mubr.bf16.gmra.mrb[0].mxu0 %v402
    %v446 = vpop.f32.mrb[0].mxu0
    %v447 = vadd.f32 0.0, %v446
    %v448 = vpop.f32.mrb[0].mxu0
    %v449 = vpop.f32.mrb[0].mxu0
    %v450 = vadd.f32 0.0, %v449
    %v451 = vpop.f32.mrb[0].mxu0
    %452 = vdwg.mxu0
    %v457 = vunpack.c.l.b16 %v364
    %v458 = vunpack.c.l.b16 %v365
    %v459 = vunpack.c.l.b16 %v366
    %v460 = vunpack.c.l.b16 %v367
    %v461 = vpack.c.b16 %v458, %v457
    %v462 = vpack.c.b16 %v460, %v459
    %v466 = vsel %vm287, %v361, 0
    %v469 = vsel %vm287, %v362, 0
    %471 = vmatprep.subr.bf16.mxu0 0
    %472 = vmatpush1.bf16.msra.mxu0 %v461
    %473 = vmatprep.subr.bf16.mxu0 0
    %474 = vmatpush1.bf16.msra.mxu0 %v462
    %475 = vmatprep.subr.bf16.mxu0 0
    %476 = vmatpush1.bf16.msra.mxu0 0
    %477 = vmatprep.subr.bf16.mxu0 0
    %478 = vmatpush1.bf16.msra.mxu0 0
    %479 = vmatprep.subr.bf16.mxu0 0
    %480 = vmatpush1.bf16.msra.mxu0 0
    %481 = vmatprep.subr.bf16.mxu0 0
    %482 = vmatpush1.bf16.msra.mxu0 0
    %483 = vmatprep.subr.bf16.mxu0 0
    %484 = vmatpush1.bf16.msra.mxu0 0
    %485 = vmatprep.subr.bf16.mxu0 0
    %486 = vmatpush1.bf16.msra.mxu0 0
    %487 = vmatprep.subr.bf16.mxu0 0
    %488 = vmatpush1.bf16.msra.mxu0 0
    %489 = vmatprep.subr.bf16.mxu0 0
    %490 = vmatpush1.bf16.msra.mxu0 0
    %491 = vmatprep.subr.bf16.mxu0 0
    %492 = vmatpush1.bf16.msra.mxu0 0
    %493 = vmatprep.subr.bf16.mxu0 0
    %494 = vmatpush1.bf16.msra.mxu0 0
    %495 = vmatprep.subr.bf16.mxu0 0
    %496 = vmatpush1.bf16.msra.mxu0 0
    %497 = vmatprep.subr.bf16.mxu0 0
    %498 = vmatpush1.bf16.msra.mxu0 0
    %499 = vmatprep.subr.bf16.mxu0 0
    %500 = vmatpush1.bf16.msra.mxu0 0
    %501 = vmatprep.subr.bf16.mxu0 0
    %502 = vmatpush1.bf16.msra.mxu0 0
    %503 = vmatprep.mubr.bf16.mxu0 0
    %504 = vmatmul.mubr.bf16.gmra.mrb[0].mxu0 %v466
    %v505 = vpop.f32.mrb[0].mxu0
    %v506 = vadd.f32 %v439, %v505
    %v507 = vpop.f32.mrb[0].mxu0
    %v508 = vpop.f32.mrb[0].mxu0
    %v509 = vadd.f32 %v442, %v508
    %v510 = vpop.f32.mrb[0].mxu0
    %511 = vmatprep.mubr.bf16.mxu0 0
    %512 = vmatmul.mubr.bf16.gmra.mrb[0].mxu0 %v469
    %v513 = vpop.f32.mrb[0].mxu0
    %v514 = vadd.f32 %v447, %v513
    %v515 = vpop.f32.mrb[0].mxu0
    %v516 = vpop.f32.mrb[0].mxu0
    %v517 = vadd.f32 %v450, %v516
    %v518 = vpop.f32.mrb[0].mxu0
    %519 = vdwg.mxu0
    %v520 = vrot.slane %v357, 2
    %v521 = vrot.slane %v358, 2
    %v522 = vrot.slane %v359, 2
    %v523 = vrot.slane %v360, 2
    %v524 = vsel %vm204, %v522, %v523
    %v525 = vsel %vm204, %v521, %v522
    %v526 = vsel %vm204, %v520, %v521
    %v527 = vsel %vm204, %v523, %v520
    %v528 = vsel %vm213, %v526, 0.0
    %v529 = vsel %vm214, %v525, 0.0
    %v530 = vsel %vm215, %v524, 0.0
    %v531 = vsel %vm216, %v527, 0.0
    %v532 = vpack.c.bf16 %v529, %v528
    %v533 = vpack.c.bf16 %v531, %v530
    %s534 = scalar_lea.vmem %s4, 32
    %v535 = vld [vmem:[%s534] sm:$0xf]
    %v536 = vld [vmem:[%s534 + $0x4] sm:$0xf]
    %v537 = vld [vmem:[%s534 + $0x8] sm:$0xf]
    %v538 = vld [vmem:[%s534 + $0xc] sm:$0xf]
    %v543 = vunpack.c.l.b16 %v535
    %v544 = vunpack.c.l.b16 %v536
    %v545 = vunpack.c.l.b16 %v537
    %v546 = vunpack.c.l.b16 %v538
    %v547 = vpack.c.b16 %v544, %v543
    %v548 = vpack.c.b16 %v546, %v545
    %v552 = vsel %vm287, %v532, 0
    %v555 = vsel %vm287, %v533, 0
    %557 = vmatprep.subr.bf16.mxu0 0
    %558 = vmatpush1.bf16.msra.mxu0 %v547
    %559 = vmatprep.subr.bf16.mxu0 0
    %560 = vmatpush1.bf16.msra.mxu0 %v548
    %561 = vmatprep.subr.bf16.mxu0 0
    %562 = vmatpush1.bf16.msra.mxu0 0
    %563 = vmatprep.subr.bf16.mxu0 0
    %564 = vmatpush1.bf16.msra.mxu0 0
    %565 = vmatprep.subr.bf16.mxu0 0
    %566 = vmatpush1.bf16.msra.mxu0 0
    %567 = vmatprep.subr.bf16.mxu0 0
    %568 = vmatpush1.bf16.msra.mxu0 0
    %569 = vmatprep.subr.bf16.mxu0 0
    %570 = vmatpush1.bf16.msra.mxu0 0
    %571 = vmatprep.subr.bf16.mxu0 0
    %572 = vmatpush1.bf16.msra.mxu0 0
    %573 = vmatprep.subr.bf16.mxu0 0
    %574 = vmatpush1.bf16.msra.mxu0 0
    %575 = vmatprep.subr.bf16.mxu0 0
    %576 = vmatpush1.bf16.msra.mxu0 0
    %577 = vmatprep.subr.bf16.mxu0 0
    %578 = vmatpush1.bf16.msra.mxu0 0
    %579 = vmatprep.subr.bf16.mxu0 0
    %580 = vmatpush1.bf16.msra.mxu0 0
    %581 = vmatprep.subr.bf16.mxu0 0
    %582 = vmatpush1.bf16.msra.mxu0 0
    %583 = vmatprep.subr.bf16.mxu0 0
    %584 = vmatpush1.bf16.msra.mxu0 0
    %585 = vmatprep.subr.bf16.mxu0 0
    %586 = vmatpush1.bf16.msra.mxu0 0
    %587 = vmatprep.subr.bf16.mxu0 0
    %588 = vmatpush1.bf16.msra.mxu0 0
    %589 = vmatprep.mubr.bf16.mxu0 0
    %590 = vmatmul.mubr.bf16.gmra.mrb[0].mxu0 %v552
    %v591 = vpop.f32.mrb[0].mxu0
    %v592 = vadd.f32 0.0, %v591
    %v593 = vpop.f32.mrb[0].mxu0
    %v594 = vpop.f32.mrb[0].mxu0
    %v595 = vadd.f32 0.0, %v594
    %v596 = vpop.f32.mrb[0].mxu0
    %597 = vmatprep.mubr.bf16.mxu0 0
    %598 = vmatmul.mubr.bf16.gmra.mrb[0].mxu0 %v555
    %v599 = vpop.f32.mrb[0].mxu0
    %v600 = vadd.f32 0.0, %v599
    %v601 = vpop.f32.mrb[0].mxu0
    %v602 = vpop.f32.mrb[0].mxu0
    %v603 = vadd.f32 0.0, %v602
    %v604 = vpop.f32.mrb[0].mxu0
    %605 = vdwg.mxu0
    %v606 = vadd.f32 %v506, %v592
    %v607 = vadd.f32 %v509, %v595
    %v608 = vadd.f32 %v514, %v600
    %v609 = vadd.f32 %v517, %v603
    %vm610 = vcmask 523264
    %v611 = vsel %vm610, %v606, 0.0
    %v612 = vsel %vm610, %v607, 0.0
    %v613 = vadd.f32 %v611, %v612
    %v614 = vsel %vm610, %v608, 0.0
    %v615 = vadd.f32 %v613, %v614
    %v616 = vsel %vm610, %v609, 0.0
    %v617 = vadd.f32 %v615, %v616
    %v618 = vrot.slane %v617, 4
    %v619 = vadd.f32 %v617, %v618
    %v620 = vrot.slane %v619, 2
    %v621 = vadd.f32 %v619, %v620
    %v622 = vrot.slane %v621, 1
    %v623 = vadd.f32 %v621, %v622
    %v624 = vmul.f32 %v623, 0.03125
    %v625 = vsub.f32 %v606, %v624
    %v626 = vsub.f32 %v607, %v624
    %v627 = vsub.f32 %v608, %v624
    %v628 = vsub.f32 %v609, %v624
    %v629 = vmul.f32 %v625, %v625
    %v630 = vmul.f32 %v626, %v626
    %v631 = vmul.f32 %v627, %v627
    %v632 = vmul.f32 %v628, %v628
    %v633 = vsel %vm610, %v629, 0.0
    %v634 = vsel %vm610, %v630, 0.0
    %v635 = vadd.f32 %v633, %v634
    %v636 = vsel %vm610, %v631, 0.0
    %v637 = vadd.f32 %v635, %v636
    %v638 = vsel %vm610, %v632, 0.0
    %v639 = vadd.f32 %v637, %v638
    %v640 = vrot.slane %v639, 4
    %v641 = vadd.f32 %v639, %v640
    %v642 = vrot.slane %v641, 2
    %v643 = vadd.f32 %v641, %v642
    %v644 = vrot.slane %v643, 1
    %v645 = vadd.f32 %v643, %v644
    %v646 = vmul.f32 %v645, 0.03125
    %v647 = vld [vmem:[%s5] sm:$0x1]
    %v648 = vadd.f32 %v646, 1e-05
    %v649 = vrsqrt.pop %v648
    %v650 = vmul.f32 %v647, %v649
    %v652 = vlaneseq
    %v653 = vshrl.u32 %v652, 7
    %v654 = vsub.s32 0, %v653
    %v655 = vrot.slane %v650, %v654
    %v657 = vmul.f32 %v625, %v655
    %v658 = vmul.f32 %v626, %v655
    %v659 = vmul.f32 %v627, %v655
    %v660 = vmul.f32 %v628, %v655
    %v661 = vld [vmem:[%s6] sm:$0x1]
    %v663 = vlaneseq
    %v664 = vshrl.u32 %v663, 7
    %v665 = vsub.s32 0, %v664
    %v666 = vrot.slane %v661, %v665
    %v668 = vadd.f32 %v657, %v666
    %v669 = vadd.f32 %v658, %v666
    %v670 = vadd.f32 %v659, %v666
    %v671 = vadd.f32 %v660, %v666
    %vm672 = vcmp.ge.f32.partialorder %v668, 0.0
    %vm673 = vcmp.ge.f32.partialorder %v669, 0.0
    %vm674 = vcmp.ge.f32.partialorder %v670, 0.0
    %vm675 = vcmp.ge.f32.partialorder %v671, 0.0
    %v676 = vmul.f32 %v668, 0.01
    %v677 = vmul.f32 %v669, 0.01
    %v678 = vmul.f32 %v670, 0.01
    %v679 = vmul.f32 %v671, 0.01
    %v680 = vsel %vm672, %v668, %v676
    %v681 = vsel %vm673, %v669, %v677
    %v682 = vsel %vm674, %v670, %v678
    %v683 = vsel %vm675, %v671, %v679
    %v684 = vpack.c.bf16 %v681, %v680
    %v685 = vpack.c.bf16 %v683, %v682
    %s686 = scalar_lea.vmem %s7, 32
    %v687 = vld [vmem:[%s686] sm:$0xf]
    %v688 = vld [vmem:[%s686 + $0x4] sm:$0xf]
    %v689 = vld [vmem:[%s686 + $0x8] sm:$0xf]
    %v690 = vld [vmem:[%s686 + $0xc] sm:$0xf]
    %v691 = vld [vmem:[%s686 + $0x10] sm:$0xf]
    %v692 = vld [vmem:[%s686 + $0x14] sm:$0xf]
    %v693 = vld [vmem:[%s686 + $0x18] sm:$0xf]
    %v694 = vld [vmem:[%s686 + $0x1c] sm:$0xf]
    %v695 = vrot.slane %v680, 6
    %v696 = vrot.slane %v681, 6
    %v697 = vrot.slane %v682, 6
    %v698 = vrot.slane %v683, 6
    %v699 = vsel %vm58, %v697, %v698
    %v700 = vsel %vm58, %v696, %v697
    %v701 = vsel %vm58, %v695, %v696
    %v702 = vsel %vm58, %v698, %v695
    %v703 = vsel %vm67, %v702, 0.0
    %v704 = vsel %vm68, %v701, 0.0
    %v705 = vsel %vm69, %v700, 0.0
    %v706 = vsel %vm70, %v699, 0.0
    %v707 = vpack.c.bf16 %v704, %v703
    %v708 = vpack.c.bf16 %v706, %v705
    %v709 = vld [vmem:[%s7] sm:$0xf]
    %v710 = vld [vmem:[%s7 + $0x4] sm:$0xf]
    %v711 = vld [vmem:[%s7 + $0x8] sm:$0xf]
    %v712 = vld [vmem:[%s7 + $0xc] sm:$0xf]
    %v713 = vld [vmem:[%s7 + $0x10] sm:$0xf]
    %v714 = vld [vmem:[%s7 + $0x14] sm:$0xf]
    %v715 = vld [vmem:[%s7 + $0x18] sm:$0xf]
    %v716 = vld [vmem:[%s7 + $0x1c] sm:$0xf]
    %v725 = vunpack.c.l.b16 %v709
    %v726 = vunpack.c.l.b16 %v710
    %v727 = vunpack.c.l.b16 %v711
    %v728 = vunpack.c.l.b16 %v712
    %v729 = vunpack.c.l.b16 %v713
    %v730 = vunpack.c.l.b16 %v714
    %v731 = vunpack.c.l.b16 %v715
    %v732 = vunpack.c.l.b16 %v716
    %v733 = vpack.c.b16 %v726, %v725
    %v734 = vpack.c.b16 %v728, %v727
    %v735 = vpack.c.b16 %v730, %v729
    %v736 = vpack.c.b16 %v732, %v731
    %v742 = vsel %vm610, %v707, 0
    %v745 = vsel %vm610, %v708, 0
    %747 = vmatprep.subr.bf16.mxu0 0
    %748 = vmatpush1.bf16.msra.mxu0 %v733
    %749 = vmatprep.subr.bf16.mxu0 0
    %750 = vmatpush1.bf16.msra.mxu0 %v734
    %751 = vmatprep.subr.bf16.mxu0 0
    %752 = vmatpush1.bf16.msra.mxu0 %v735
    %753 = vmatprep.subr.bf16.mxu0 0
    %754 = vmatpush1.bf16.msra.mxu0 %v736
    %755 = vmatprep.subr.bf16.mxu0 0
    %756 = vmatpush1.bf16.msra.mxu0 0
    %757 = vmatprep.subr.bf16.mxu0 0
    %758 = vmatpush1.bf16.msra.mxu0 0
    %759 = vmatprep.subr.bf16.mxu0 0
    %760 = vmatpush1.bf16.msra.mxu0 0
    %761 = vmatprep.subr.bf16.mxu0 0
    %762 = vmatpush1.bf16.msra.mxu0 0
    %763 = vmatprep.subr.bf16.mxu0 0
    %764 = vmatpush1.bf16.msra.mxu0 0
    %765 = vmatprep.subr.bf16.mxu0 0
    %766 = vmatpush1.bf16.msra.mxu0 0
    %767 = vmatprep.subr.bf16.mxu0 0
    %768 = vmatpush1.bf16.msra.mxu0 0
    %769 = vmatprep.subr.bf16.mxu0 0
    %770 = vmatpush1.bf16.msra.mxu0 0
    %771 = vmatprep.subr.bf16.mxu0 0
    %772 = vmatpush1.bf16.msra.mxu0 0
    %773 = vmatprep.subr.bf16.mxu0 0
    %774 = vmatpush1.bf16.msra.mxu0 0
    %775 = vmatprep.subr.bf16.mxu0 0
    %776 = vmatpush1.bf16.msra.mxu0 0
    %777 = vmatprep.subr.bf16.mxu0 0
    %778 = vmatpush1.bf16.msra.mxu0 0
    %779 = vmatprep.mubr.bf16.mxu0 0
    %780 = vmatmul.mubr.bf16.gmra.mrb[0].mxu0 %v742
    %v781 = vpop.f32.mrb[0].mxu0
    %v782 = vadd.f32 0.0, %v781
    %v783 = vpop.f32.mrb[0].mxu0
    %v784 = vpop.f32.mrb[0].mxu0
    %v785 = vadd.f32 0.0, %v784
    %v786 = vpop.f32.mrb[0].mxu0
    %787 = vmatprep.mubr.bf16.mxu0 0
    %788 = vmatmul.mubr.bf16.gmra.mrb[0].mxu0 %v745
    %v789 = vpop.f32.mrb[0].mxu0
    %v790 = vadd.f32 0.0, %v789
    %v791 = vpop.f32.mrb[0].mxu0
    %v792 = vpop.f32.mrb[0].mxu0
    %v793 = vadd.f32 0.0, %v792
    %v794 = vpop.f32.mrb[0].mxu0
    %795 = vdwg.mxu0
    %v804 = vunpack.c.l.b16 %v687
    %v805 = vunpack.c.l.b16 %v688
    %v806 = vunpack.c.l.b16 %v689
    %v807 = vunpack.c.l.b16 %v690
    %v808 = vunpack.c.l.b16 %v691
    %v809 = vunpack.c.l.b16 %v692
    %v810 = vunpack.c.l.b16 %v693
    %v811 = vunpack.c.l.b16 %v694
    %v812 = vpack.c.b16 %v805, %v804
    %v813 = vpack.c.b16 %v807, %v806
    %v814 = vpack.c.b16 %v809, %v808
    %v815 = vpack.c.b16 %v811, %v810
    %v821 = vsel %vm610, %v684, 0
    %v824 = vsel %vm610, %v685, 0
    %826 = vmatprep.subr.bf16.mxu0 0
    %827 = vmatpush1.bf16.msra.mxu0 %v812
    %828 = vmatprep.subr.bf16.mxu0 0
    %829 = vmatpush1.bf16.msra.mxu0 %v813
    %830 = vmatprep.subr.bf16.mxu0 0
    %831 = vmatpush1.bf16.msra.mxu0 %v814
    %832 = vmatprep.subr.bf16.mxu0 0
    %833 = vmatpush1.bf16.msra.mxu0 %v815
    %834 = vmatprep.subr.bf16.mxu0 0
    %835 = vmatpush1.bf16.msra.mxu0 0
    %836 = vmatprep.subr.bf16.mxu0 0
    %837 = vmatpush1.bf16.msra.mxu0 0
    %838 = vmatprep.subr.bf16.mxu0 0
    %839 = vmatpush1.bf16.msra.mxu0 0
    %840 = vmatprep.subr.bf16.mxu0 0
    %841 = vmatpush1.bf16.msra.mxu0 0
    %842 = vmatprep.subr.bf16.mxu0 0
    %843 = vmatpush1.bf16.msra.mxu0 0
    %844 = vmatprep.subr.bf16.mxu0 0
    %845 = vmatpush1.bf16.msra.mxu0 0
    %846 = vmatprep.subr.bf16.mxu0 0
    %847 = vmatpush1.bf16.msra.mxu0 0
    %848 = vmatprep.subr.bf16.mxu0 0
    %849 = vmatpush1.bf16.msra.mxu0 0
    %850 = vmatprep.subr.bf16.mxu0 0
    %851 = vmatpush1.bf16.msra.mxu0 0
    %852 = vmatprep.subr.bf16.mxu0 0
    %853 = vmatpush1.bf16.msra.mxu0 0
    %854 = vmatprep.subr.bf16.mxu0 0
    %855 = vmatpush1.bf16.msra.mxu0 0
    %856 = vmatprep.subr.bf16.mxu0 0
    %857 = vmatpush1.bf16.msra.mxu0 0
    %858 = vmatprep.mubr.bf16.mxu0 0
    %859 = vmatmul.mubr.bf16.gmra.mrb[0].mxu0 %v821
    %v860 = vpop.f32.mrb[0].mxu0
    %v861 = vadd.f32 %v782, %v860
    %v862 = vpop.f32.mrb[0].mxu0
    %v863 = vpop.f32.mrb[0].mxu0
    %v864 = vadd.f32 %v785, %v863
    %v865 = vpop.f32.mrb[0].mxu0
    %866 = vmatprep.mubr.bf16.mxu0 0
    %867 = vmatmul.mubr.bf16.gmra.mrb[0].mxu0 %v824
    %v868 = vpop.f32.mrb[0].mxu0
    %v869 = vadd.f32 %v790, %v868
    %v870 = vpop.f32.mrb[0].mxu0
    %v871 = vpop.f32.mrb[0].mxu0
    %v872 = vadd.f32 %v793, %v871
    %v873 = vpop.f32.mrb[0].mxu0
    %874 = vdwg.mxu0
    %v875 = vrot.slane %v680, 2
    %v876 = vrot.slane %v681, 2
    %v877 = vrot.slane %v682, 2
    %v878 = vrot.slane %v683, 2
    %v879 = vsel %vm204, %v877, %v878
    %v880 = vsel %vm204, %v876, %v877
    %v881 = vsel %vm204, %v875, %v876
    %v882 = vsel %vm204, %v878, %v875
    %v883 = vsel %vm213, %v881, 0.0
    %v884 = vsel %vm214, %v880, 0.0
    %v885 = vsel %vm215, %v879, 0.0
    %v886 = vsel %vm216, %v882, 0.0
    %v887 = vpack.c.bf16 %v884, %v883
    %v888 = vpack.c.bf16 %v886, %v885
    %s889 = scalar_lea.vmem %s7, 64
    %v890 = vld [vmem:[%s889] sm:$0xf]
    %v891 = vld [vmem:[%s889 + $0x4] sm:$0xf]
    %v892 = vld [vmem:[%s889 + $0x8] sm:$0xf]
    %v893 = vld [vmem:[%s889 + $0xc] sm:$0xf]
    %v894 = vld [vmem:[%s889 + $0x10] sm:$0xf]
    %v895 = vld [vmem:[%s889 + $0x14] sm:$0xf]
    %v896 = vld [vmem:[%s889 + $0x18] sm:$0xf]
    %v897 = vld [vmem:[%s889 + $0x1c] sm:$0xf]
    %v906 = vunpack.c.l.b16 %v890
    %v907 = vunpack.c.l.b16 %v891
    %v908 = vunpack.c.l.b16 %v892
    %v909 = vunpack.c.l.b16 %v893
    %v910 = vunpack.c.l.b16 %v894
    %v911 = vunpack.c.l.b16 %v895
    %v912 = vunpack.c.l.b16 %v896
    %v913 = vunpack.c.l.b16 %v897
    %v914 = vpack.c.b16 %v907, %v906
    %v915 = vpack.c.b16 %v909, %v908
    %v916 = vpack.c.b16 %v911, %v910
    %v917 = vpack.c.b16 %v913, %v912
    %v923 = vsel %vm610, %v887, 0
    %v926 = vsel %vm610, %v888, 0
    %928 = vmatprep.subr.bf16.mxu0 0
    %929 = vmatpush1.bf16.msra.mxu0 %v914
    %930 = vmatprep.subr.bf16.mxu0 0
    %931 = vmatpush1.bf16.msra.mxu0 %v915
    %932 = vmatprep.subr.bf16.mxu0 0
    %933 = vmatpush1.bf16.msra.mxu0 %v916
    %934 = vmatprep.subr.bf16.mxu0 0
    %935 = vmatpush1.bf16.msra.mxu0 %v917
    %936 = vmatprep.subr.bf16.mxu0 0
    %937 = vmatpush1.bf16.msra.mxu0 0
    %938 = vmatprep.subr.bf16.mxu0 0
    %939 = vmatpush1.bf16.msra.mxu0 0
    %940 = vmatprep.subr.bf16.mxu0 0
    %941 = vmatpush1.bf16.msra.mxu0 0
    %942 = vmatprep.subr.bf16.mxu0 0
    %943 = vmatpush1.bf16.msra.mxu0 0
    %944 = vmatprep.subr.bf16.mxu0 0
    %945 = vmatpush1.bf16.msra.mxu0 0
    %946 = vmatprep.subr.bf16.mxu0 0
    %947 = vmatpush1.bf16.msra.mxu0 0
    %948 = vmatprep.subr.bf16.mxu0 0
    %949 = vmatpush1.bf16.msra.mxu0 0
    %950 = vmatprep.subr.bf16.mxu0 0
    %951 = vmatpush1.bf16.msra.mxu0 0
    %952 = vmatprep.subr.bf16.mxu0 0
    %953 = vmatpush1.bf16.msra.mxu0 0
    %954 = vmatprep.subr.bf16.mxu0 0
    %955 = vmatpush1.bf16.msra.mxu0 0
    %956 = vmatprep.subr.bf16.mxu0 0
    %957 = vmatpush1.bf16.msra.mxu0 0
    %958 = vmatprep.subr.bf16.mxu0 0
    %959 = vmatpush1.bf16.msra.mxu0 0
    %960 = vmatprep.mubr.bf16.mxu0 0
    %961 = vmatmul.mubr.bf16.gmra.mrb[0].mxu0 %v923
    %v962 = vpop.f32.mrb[0].mxu0
    %v963 = vadd.f32 0.0, %v962
    %v964 = vpop.f32.mrb[0].mxu0
    %v965 = vpop.f32.mrb[0].mxu0
    %v966 = vadd.f32 0.0, %v965
    %v967 = vpop.f32.mrb[0].mxu0
    %968 = vmatprep.mubr.bf16.mxu0 0
    %969 = vmatmul.mubr.bf16.gmra.mrb[0].mxu0 %v926
    %v970 = vpop.f32.mrb[0].mxu0
    %v971 = vadd.f32 0.0, %v970
    %v972 = vpop.f32.mrb[0].mxu0
    %v973 = vpop.f32.mrb[0].mxu0
    %v974 = vadd.f32 0.0, %v973
    %v975 = vpop.f32.mrb[0].mxu0
    %976 = vdwg.mxu0
    %v977 = vadd.f32 %v861, %v963
    %v978 = vadd.f32 %v864, %v966
    %v979 = vadd.f32 %v869, %v971
    %v980 = vadd.f32 %v872, %v974
    %v981 = vadd.f32 %v977, %v978
    %v982 = vadd.f32 %v981, %v979
    %v983 = vadd.f32 %v982, %v980
    %v984 = vrot.slane %v983, 4
    %v985 = vadd.f32 %v983, %v984
    %v986 = vrot.slane %v985, 2
    %v987 = vadd.f32 %v985, %v986
    %v988 = vrot.slane %v987, 1
    %v989 = vadd.f32 %v987, %v988
    %v990 = vmul.f32 %v989, 0.03125
    %v991 = vsub.f32 %v977, %v990
    %v992 = vsub.f32 %v978, %v990
    %v993 = vsub.f32 %v979, %v990
    %v994 = vsub.f32 %v980, %v990
    %v995 = vmul.f32 %v991, %v991
    %v996 = vmul.f32 %v992, %v992
    %v997 = vmul.f32 %v993, %v993
    %v998 = vmul.f32 %v994, %v994
    %v999 = vadd.f32 %v995, %v996
    %v1000 = vadd.f32 %v999, %v997
    %v1001 = vadd.f32 %v1000, %v998
    %v1002 = vrot.slane %v1001, 4
    %v1003 = vadd.f32 %v1001, %v1002
    %v1004 = vrot.slane %v1003, 2
    %v1005 = vadd.f32 %v1003, %v1004
    %v1006 = vrot.slane %v1005, 1
    %v1007 = vadd.f32 %v1005, %v1006
    %v1008 = vmul.f32 %v1007, 0.03125
    %v1009 = vld [vmem:[%s8] sm:$0x1]
    %v1010 = vadd.f32 %v1008, 1e-05
    %v1011 = vrsqrt.pop %v1010
    %v1012 = vmul.f32 %v1009, %v1011
    %v1014 = vlaneseq
    %v1015 = vshrl.u32 %v1014, 7
    %v1016 = vsub.s32 0, %v1015
    %v1017 = vrot.slane %v1012, %v1016
    %v1019 = vmul.f32 %v991, %v1017
    %v1020 = vmul.f32 %v992, %v1017
    %v1021 = vmul.f32 %v993, %v1017
    %v1022 = vmul.f32 %v994, %v1017
    %v1023 = vld [vmem:[%s9] sm:$0x1]
    %v1025 = vlaneseq
    %v1026 = vshrl.u32 %v1025, 7
    %v1027 = vsub.s32 0, %v1026
    %v1028 = vrot.slane %v1023, %v1027
    %v1030 = vadd.f32 %v1019, %v1028
    %v1031 = vadd.f32 %v1020, %v1028
    %v1032 = vadd.f32 %v1021, %v1028
    %v1033 = vadd.f32 %v1022, %v1028
    %vm1034 = vcmp.ge.f32.partialorder %v1030, 0.0
    %vm1035 = vcmp.ge.f32.partialorder %v1031, 0.0
    %vm1036 = vcmp.ge.f32.partialorder %v1032, 0.0
    %vm1037 = vcmp.ge.f32.partialorder %v1033, 0.0
    %v1038 = vmul.f32 %v1030, 0.01
    %v1039 = vmul.f32 %v1031, 0.01
    %v1040 = vmul.f32 %v1032, 0.01
    %v1041 = vmul.f32 %v1033, 0.01
    %v1042 = vsel %vm1034, %v1030, %v1038
    %v1043 = vsel %vm1035, %v1031, %v1039
    %v1044 = vsel %vm1036, %v1032, %v1040
    %v1045 = vsel %vm1037, %v1033, %v1041
    %1046 = vst [vmem:[#allocation2] sm:$0xff] %v1042
    %1047 = vst [vmem:[#allocation2 + $0x8] sm:$0xff] %v1043
    %1048 = vst [vmem:[#allocation2 + $0x10] sm:$0xff] %v1044
    %1049 = vst [vmem:[#allocation2 + $0x18] sm:$0xff] %v1045
    // Predicated region
    $region42: #{conv_layers_forward.1} parent=1 // pred_check
      _
    $region43: #{conv_layers_forward.1} parent=1 // pred_check_branch
      %1051 = sbr.rel (0) target = $region45
    $region44: #{conv_layers_forward.1} parent=1 // pred_region
      %s1053 = ssub.s32 512, 512
      %1054 = vsyncadd [#allocation3], %s1053
      %s1055 = sshll.u32 [#allocation2], 4
      %s1056 = int_to_ptr.vmem [resolvable:$true] %s1055
      %1061 = dma.vmem_to_hbm [thread:$0]  %s1056, 512, %s10, [#allocation3], 128, 128, 8
    $region45: #{conv_layers_forward.1} parent=1 // pred_fallthru
      _
    // Predicated region
    $region46: #{conv_layers_forward.1} parent=1 // pred_check
      _
    $region47: #{conv_layers_forward.1} parent=1 // pred_check_branch
      %1063 = sbr.rel (0) target = $region49
    $region48: #{conv_layers_forward.1} parent=1 // pred_region
      %1064 = dma.done [#allocation3], 512
    $region49: #{conv_layers_forward.1} parent=1 // pred_fallthru
      _
    %1065 = vsyncpa [#allocation3], 1

</llo_original>
